<compile_context>
chip_gen: v7x
topology: tpu7x:2x2x1
jax: 0.10.0
libtpu: 0.0.40
codegen_flags: <defaults>
</compile_context>

<pallas_src>
import math

import jax
import jax.numpy as jnp
from jax.experimental import pallas as pl
from jax.experimental.pallas import tpu as pltpu


# ---------------- Pallas kernel: one grid step == one batch element ----------------
def _se_kernel(x_ref, m_ref, w1_ref, w2_ref, o_ref):
    """Block shapes:
      x_ref : (1, C, HW)      channels on sublanes, spatial on lanes (natural layout)
      m_ref : (1, 1, HW)      validity mask as f32 (1.0 = valid)
      w1_ref: (HID_pad, C)    bias-free FC1, hidden rows zero-padded to a sublane multiple
      w2_ref: (C, HID_pad)    bias-free FC2, hidden cols zero-padded (exact: relu(0)=0)
      o_ref : (1, C, HW)
    """
    x = x_ref[0].astype(jnp.float32)                       # (C, HW)
    m = m_ref[0]                                           # (1, HW)

    # ---- masked global average pool (exact divide; off the critical path) ----
    n = jnp.sum(m, axis=1, keepdims=True)                  # (1, 1)
    n = jnp.where(n == 0.0, 1.0, n)                        # masked_fill_(n == 0, 1)
    pooled = jnp.sum(x * m, axis=1, keepdims=True) / n     # (C, 1)

    # ---- bias-free bottleneck MLP: sigmoid(W2 @ relu(W1 @ y)) ----
    h = jnp.maximum(
        jnp.dot(w1_ref[...], pooled, preferred_element_type=jnp.float32), 0.0)   # (HID_pad, 1)
    z = jnp.dot(w2_ref[...], h, preferred_element_type=jnp.float32)              # (C, 1)
    gate = 1.0 / (1.0 + jnp.exp(-z))                                             # exact sigmoid

    # ---- scale: gate column lane-broadcasts across the spatial axis ----
    o_ref[0] = (x * gate).astype(o_ref.dtype)


# ---------------- wrapper ----------------
def squeeze_and_excitation_2d(x, mask, w1, w2):
    """x: (B, C, H, W); mask: (B, 1, H, W) bool/float; w1: (C//r, C); w2: (C, C//r)."""
    B, C, H, W = x.shape
    hid = w1.shape[0]
    HW = H * W

    # free reshapes into the natural (B, C, HW) layout; mask cast is C-times smaller than x
    x3 = x.reshape(B, C, HW)
    m3 = mask.astype(jnp.float32).reshape(B, 1, HW)

    # zero-pad the hidden dim up to a sublane multiple (exact: padded hidden units are
    # relu(0) = 0 and meet zero columns of W2)
    hid_pad = max(8, ((hid + 7) // 8) * 8)
    w1p = jnp.zeros((hid_pad, C), jnp.float32).at[:hid, :].set(w1.astype(jnp.float32))
    w2p = jnp.zeros((C, hid_pad), jnp.float32).at[:, :hid].set(w2.astype(jnp.float32))

    out3 = pl.pallas_call(
        _se_kernel,
        grid=(B,),
        in_specs=[
            pl.BlockSpec((1, C, HW), lambda b: (b, 0, 0)),       # per-batch x tile (pipelined)
            pl.BlockSpec((1, 1, HW), lambda b: (b, 0, 0)),       # per-batch mask tile
            pl.BlockSpec((hid_pad, C), lambda b: (0, 0)),        # constant index -> resident
            pl.BlockSpec((C, hid_pad), lambda b: (0, 0)),        # constant index -> resident
        ],
        out_specs=pl.BlockSpec((1, C, HW), lambda b: (b, 0, 0)),
        out_shape=jax.ShapeDtypeStruct((B, C, HW), x.dtype),
        compiler_params=pltpu.CompilerParams(
            dimension_semantics=("parallel",)),                  # megacore batch split on v7x
    )(x3, m3, w1p, w2p)

    return out3.reshape(B, C, H, W)


# ---------------- pure-JAX reference (for a sanity check) ----------------
def _se_reference(x, mask, w1, w2):
    m = mask.astype(jnp.float32)
    n = jnp.sum(m, axis=(2, 3))
    n = jnp.where(n == 0.0, 1.0, n)
    y = jnp.sum(x * m, axis=(2, 3)) / n                    # (B, C)
    y = jnp.maximum(y @ w1.T, 0.0)
    y = jax.nn.sigmoid(y @ w2.T)
    return x * y[:, :, None, None]


# ---------------- demo ----------------
if __name__ == "__main__":
    B, C, H, W = 2, 32, 16, 16
    REDUCTION = 16
    HID = C // REDUCTION

    key = jax.random.PRNGKey(0)
    kx, k1, k2 = jax.random.split(key, 3)
    x = jax.random.normal(kx, (B, C, H, W), jnp.float32)

    # spatial validity mask: first `lengths[b]` columns of every row are valid
    lengths = jnp.array([13, 9])
    mask = (jnp.arange(W)[None, None, None, :] < lengths[:, None, None, None])
    mask = jnp.broadcast_to(mask, (B, 1, H, W))

    w1 = (jax.random.normal(k1, (HID, C)) / math.sqrt(C)).astype(jnp.float32)
    w2 = (jax.random.normal(k2, (C, HID)) / math.sqrt(HID)).astype(jnp.float32)

    out = squeeze_and_excitation_2d(x, mask, w1, w2)
    jax.block_until_ready(out)

    ref = _se_reference(x, mask, w1, w2)
    assert out.shape == (B, C, H, W)
    assert jnp.allclose(out, ref, rtol=1e-4, atol=1e-5), float(jnp.max(jnp.abs(out - ref)))
    print("KERNEL_OK")
</pallas_src>

<mosaic_0001>
module attributes {stable_mosaic.version = 11 : i64} {
  func.func @_se_kernel(%arg0: i32, %arg1: memref<1x32x256xf32, #tpu.memory_space<vmem>>, %arg2: memref<1x1x256xf32, #tpu.memory_space<vmem>>, %arg3: memref<8x32xf32, #tpu.memory_space<vmem>>, %arg4: memref<32x8xf32, #tpu.memory_space<vmem>>, %arg5: memref<1x32x256xf32, #tpu.memory_space<vmem>>) attributes {dimension_semantics = [#tpu.dimension_semantics<parallel>], iteration_bounds = array<i64: 2>, scalar_prefetch = 0 : i64, scratch_operands = 0 : i64, tpu.core_type = #tpu.core_type<tc>, window_params = [{transform_indices = @transform_0, window_bounds = array<i64: 1, 32, 256>}, {transform_indices = @transform_1, window_bounds = array<i64: 1, 1, 256>}, {pipeline_mode = #tpu.pipeline_mode<synchronous>, transform_indices = @transform_2, window_bounds = array<i64: 8, 32>}, {pipeline_mode = #tpu.pipeline_mode<synchronous>, transform_indices = @transform_3, window_bounds = array<i64: 32, 8>}, {transform_indices = @transform_4, window_bounds = array<i64: 1, 32, 256>}]} {
    %c0 = arith.constant 0 : index
    %c0_0 = arith.constant 0 : index
    %c0_1 = arith.constant 0 : index
    %0 = vector.load %arg1[%c0, %c0_0, %c0_1] : memref<1x32x256xf32, #tpu.memory_space<vmem>>, vector<1x32x256xf32>
    %1 = vector.shape_cast %0 : vector<1x32x256xf32> to vector<32x256xf32>
    %c0_2 = arith.constant 0 : index
    %c0_3 = arith.constant 0 : index
    %c0_4 = arith.constant 0 : index
    %2 = vector.load %arg2[%c0_2, %c0_3, %c0_4] : memref<1x1x256xf32, #tpu.memory_space<vmem>>, vector<1x1x256xf32>
    %3 = vector.shape_cast %2 : vector<1x1x256xf32> to vector<1x256xf32>
    %cst = arith.constant dense<0.000000e+00> : vector<1xf32>
    %4 = vector.multi_reduction <add>, %3, %cst [1] : vector<1x256xf32> to vector<1xf32>
    %5 = vector.shape_cast %4 : vector<1xf32> to vector<1x1xf32>
    %cst_5 = arith.constant 0.000000e+00 : f32
    %6 = vector.broadcast %cst_5 : f32 to vector<1x1xf32>
    %7 = arith.cmpf oeq, %5, %6 : vector<1x1xf32>
    %cst_6 = arith.constant 1.000000e+00 : f32
    %8 = vector.broadcast %cst_6 : f32 to vector<1x1xf32>
    %9 = arith.select %7, %8, %5 : vector<1x1xi1>, vector<1x1xf32>
    %10 = vector.broadcast %3 : vector<1x256xf32> to vector<32x256xf32>
    %11 = arith.mulf %1, %10 : vector<32x256xf32>
    %cst_7 = arith.constant dense<0.000000e+00> : vector<32xf32>
    %12 = vector.multi_reduction <add>, %11, %cst_7 [1] : vector<32x256xf32> to vector<32xf32>
    %13 = vector.shape_cast %12 : vector<32xf32> to vector<32x1xf32>
    %14 = vector.broadcast %9 : vector<1x1xf32> to vector<32x1xf32>
    %15 = arith.divf %13, %14 : vector<32x1xf32>
    %c0_8 = arith.constant 0 : index
    %c0_9 = arith.constant 0 : index
    %16 = vector.load %arg3[%c0_8, %c0_9] : memref<8x32xf32, #tpu.memory_space<vmem>>, vector<8x32xf32>
    %cst_10 = arith.constant dense<0.000000e+00> : vector<8x1xf32>
    %17 = tpu.matmul %16, %15, %cst_10 {dimension_numbers = #tpu.dot_dimension_numbers<[1], [0], [0], [1], [0, 0, 1, 1], [], []>} : vector<8x32xf32>, vector<32x1xf32>, vector<8x1xf32> -> vector<8x1xf32>
    %cst_11 = arith.constant 0.000000e+00 : f32
    %18 = vector.broadcast %cst_11 : f32 to vector<8x1xf32>
    %19 = arith.maximumf %17, %18 : vector<8x1xf32>
    %c0_12 = arith.constant 0 : index
    %c0_13 = arith.constant 0 : index
    %20 = vector.load %arg4[%c0_12, %c0_13] : memref<32x8xf32, #tpu.memory_space<vmem>>, vector<32x8xf32>
    %cst_14 = arith.constant dense<0.000000e+00> : vector<32x1xf32>
    %21 = tpu.matmul %20, %19, %cst_14 {dimension_numbers = #tpu.dot_dimension_numbers<[1], [0], [0], [1], [0, 0, 1, 1], [], []>} : vector<32x8xf32>, vector<8x1xf32>, vector<32x1xf32> -> vector<32x1xf32>
    %cst_15 = arith.constant 0.000000e+00 : f32
    %22 = vector.broadcast %cst_15 : f32 to vector<32x1xf32>
    %23 = arith.subf %22, %21 : vector<32x1xf32>
    %24 = math.exp %23 : vector<32x1xf32>
    %cst_16 = arith.constant 1.000000e+00 : f32
    %25 = vector.broadcast %cst_16 : f32 to vector<32x1xf32>
    %26 = arith.addf %25, %24 : vector<32x1xf32>
    %cst_17 = arith.constant 1.000000e+00 : f32
    %27 = vector.broadcast %cst_17 : f32 to vector<32x1xf32>
    %28 = arith.divf %27, %26 : vector<32x1xf32>
    %29 = vector.broadcast %28 : vector<32x1xf32> to vector<32x256xf32>
    %30 = arith.mulf %1, %29 : vector<32x256xf32>
    %c0_18 = arith.constant 0 : index
    %c0_19 = arith.constant 0 : index
    %c0_20 = arith.constant 0 : index
    %31 = vector.load %arg5[%c0_18, %c0_19, %c0_20] : memref<1x32x256xf32, #tpu.memory_space<vmem>>, vector<1x32x256xf32>
    %32 = vector.shape_cast %31 : vector<1x32x256xf32> to vector<32x256xf32>
    %33 = vector.shape_cast %30 : vector<32x256xf32> to vector<1x32x256xf32>
    tpu.vector_store %arg5[%c0_18, %c0_19, %c0_20], %33 {strides = array<i32>} : memref<1x32x256xf32, #tpu.memory_space<vmem>>, vector<1x32x256xf32>,
    return
  }
  func.func @transform_0(%arg0: i32) -> (i32, i32, i32) {
    %c0_i32 = arith.constant 0 : i32
    %c0_i32_0 = arith.constant 0 : i32
    %c0_i32_1 = arith.constant 0 : i32
    return %arg0, %c0_i32, %c0_i32_0 : i32, i32, i32
  }
  func.func @transform_1(%arg0: i32) -> (i32, i32, i32) {
    %c0_i32 = arith.constant 0 : i32
    %c0_i32_0 = arith.constant 0 : i32
    %c0_i32_1 = arith.constant 0 : i32
    return %arg0, %c0_i32, %c0_i32_0 : i32, i32, i32
  }
  func.func @transform_2(%arg0: i32) -> (i32, i32) {
    %c0_i32 = arith.constant 0 : i32
    %c0_i32_0 = arith.constant 0 : i32
    %c0_i32_1 = arith.constant 0 : i32
    return %c0_i32, %c0_i32_0 : i32, i32
  }
  func.func @transform_3(%arg0: i32) -> (i32, i32) {
    %c0_i32 = arith.constant 0 : i32
    %c0_i32_0 = arith.constant 0 : i32
    %c0_i32_1 = arith.constant 0 : i32
    return %c0_i32, %c0_i32_0 : i32, i32
  }
  func.func @transform_4(%arg0: i32) -> (i32, i32, i32) {
    %c0_i32 = arith.constant 0 : i32
    %c0_i32_0 = arith.constant 0 : i32
    %c0_i32_1 = arith.constant 0 : i32
    return %arg0, %c0_i32, %c0_i32_0 : i32, i32, i32
  }
}

</mosaic_0001>

<llo_original>
// kernel: tpu_custom_call.1
$region0: #{tpu_custom_call.1}
  #allocation0 [shape = 'u32[]', space=smem, size = 0x4, offset = 0x4, fixed_abs, tag = 'smem constant byte address 0x4 - core index']
  #allocation1 [shape = 'u32[144,128]{1,0:T(1,128)}', space=vmem, size = 0x12000, scoped, tag = 'internal scratch']
  %s0 = inlined_call_operand.hbm [shape: f32[2,32,256], index: 0, kind: input, shape index: {}]
  %s1 = inlined_call_operand.vmem [shape: f32[2,1,256], index: 1, kind: input, shape index: {}]
  %s2 = inlined_call_operand.vmem [shape: f32[8,32], index: 2, kind: input, shape index: {}]
  %s3 = inlined_call_operand.vmem [shape: f32[32,8], index: 3, kind: input, shape index: {}]
  %s4 = inlined_call_operand.hbm [shape: f32[2,32,256], index: 4, kind: output, shape index: {}]
  %s5 = sld [smem:[#allocation0]]
  $region53: #{tpu_custom_call.1} parent=0
    _
  %s7 = ssub.s32 1, %s5
  %s8 = scalar_select 0, %s7, %s5
  $region1: #{tpu_custom_call.1} parent=0
    #allocation2 [shape = 'u8[65536]{0}', space=vmem, size = 0x10000, scoped, tag = 'input window, operand 0']
    #allocation3 [shape = 's32[2]{0}', space=sflag, size = 0x8, scoped, tag = 'scoped memory for tpu_custom_call.1']
    #allocation4 [shape = 's32[2]{0}', space=sflag, size = 0x8, scoped, tag = 'scoped memory for tpu_custom_call.1']
    #allocation5 [shape = 'u8[65536]{0}', space=vmem, size = 0x10000, scoped, tag = 'output window, operand 0']
    %9 = vsyncpa [#allocation3], 0
    %s10 = scalar_lea.sflag [#allocation3], 1
    %11 = vsyncpa %s10, 0
    %12 = vsyncpa [#allocation4], 0
    %s13 = scalar_lea.sflag [#allocation4], 1
    %14 = vsyncpa %s13, 0
    loop: start=0, step=1, limit=4
    $region2: #{tpu_custom_call.1} parent=1 // loop_pre_header
      _
    $region3: #{tpu_custom_call.1} parent=1 // loop_header
      %s16 = sphi 0, %s20
      %p17 = scmp.ge.s32.totalorder %s16, 4
      %s26 = sphi 0, %s28
      %s29 = sphi 0, %s26
      %s30 = sphi 0, %s29
      %s46 = sphi 0, %s30
      %s52 = sphi 0, %s54
      %s55 = sphi 0, %s52
      %s56 = sphi 0, %s55
      %s72 = sphi 0, %s56
      %s76 = sphi 0, %s76
      %s78 = sphi 0, %s76
      %s79 = sphi 0, %s78
      %s93 = sphi 0, %s79
      %s97 = sphi 0, %s97
      %s99 = sphi 0, %s97
      %s100 = sphi 0, %s99
      %s114 = sphi 0, %s100
      %s120 = sphi 0, %s122
      %s123 = sphi 0, %s120
      %s124 = sphi 0, %s123
      %s140 = sphi 0, %s124
    $region4: #{tpu_custom_call.1} parent=1 // loop_header_branch
      %19 = sbr.rel (%p17) target = $region8
    $region5: #{tpu_custom_call.1} parent=1 // loop_body
      %s21 = ssub.s32 %s16, 1
      %s22 = ssub.s32 %s16, 2
      %s23 = sadd.s32 %s16, 1
      %s24 = ssub.s32 %s16, %s23
      %p25 = scmp.eq.s32.totalorder %s24, 0
      %s27 = sadd.s32 %s26, 1
      %s28 = scalar_select %p25, %s26, %s27
      %p31 = pneg %p25
      %p32 = scmp.eq.s32.totalorder %s16, 1
      %p33 = por %p31, %p32
      %p34 = scmp.ne.s32.totalorder %s26, %s29
      %p35 = scmp.eq.s32.totalorder %s16, 0
      %p36 = por %p34, %p35
      %p37 = scmp.ne.s32.totalorder %s26, %s29
      %p38 = scmp.eq.s32.totalorder %s21, 1
      %p39 = por %p37, %p38
      %p40 = scmp.ne.s32.totalorder %s29, %s30
      %p41 = scmp.eq.s32.totalorder %s21, 0
      %p42 = por %p40, %p41
      %p43 = scmp.ne.s32.totalorder %s29, %s30
      %p44 = scmp.eq.s32.totalorder %s22, 1
      %p45 = por %p43, %p44
      %p47 = scmp.ne.s32.totalorder %s30, %s46
      %p48 = scmp.eq.s32.totalorder %s22, 0
      %p49 = por %p47, %p48
      %s50 = ssub.s32 %s16, %s23
      %p51 = scmp.eq.s32.totalorder %s50, 0
      %s53 = sadd.s32 %s52, 1
      %s54 = scalar_select %p51, %s52, %s53
      %p57 = pneg %p51
      %p58 = scmp.eq.s32.totalorder %s16, 1
      %p59 = por %p57, %p58
      %p60 = scmp.ne.s32.totalorder %s52, %s55
      %p61 = scmp.eq.s32.totalorder %s16, 0
      %p62 = por %p60, %p61
      %p63 = scmp.ne.s32.totalorder %s52, %s55
      %p64 = scmp.eq.s32.totalorder %s21, 1
      %p65 = por %p63, %p64
      %p66 = scmp.ne.s32.totalorder %s55, %s56
      %p67 = scmp.eq.s32.totalorder %s21, 0
      %p68 = por %p66, %p67
      %p69 = scmp.ne.s32.totalorder %s55, %s56
      %p70 = scmp.eq.s32.totalorder %s22, 1
      %p71 = por %p69, %p70
      %p73 = scmp.ne.s32.totalorder %s56, %s72
      %p74 = scmp.eq.s32.totalorder %s22, 0
      %p75 = por %p73, %p74
      %s77 = sadd.s32 %s76, 1
      %p80 = scmp.eq.s32.totalorder %s16, 1
      %p81 = scmp.ne.s32.totalorder %s76, %s78
      %p82 = scmp.eq.s32.totalorder %s16, 0
      %p83 = por %p81, %p82
      %p84 = scmp.ne.s32.totalorder %s76, %s78
      %p85 = scmp.eq.s32.totalorder %s21, 1
      %p86 = por %p84, %p85
      %p87 = scmp.ne.s32.totalorder %s78, %s79
      %p88 = scmp.eq.s32.totalorder %s21, 0
      %p89 = por %p87, %p88
      %p90 = scmp.ne.s32.totalorder %s78, %s79
      %p91 = scmp.eq.s32.totalorder %s22, 1
      %p92 = por %p90, %p91
      %p94 = scmp.ne.s32.totalorder %s79, %s93
      %p95 = scmp.eq.s32.totalorder %s22, 0
      %p96 = por %p94, %p95
      %s98 = sadd.s32 %s97, 1
      %p101 = scmp.eq.s32.totalorder %s16, 1
      %p102 = scmp.ne.s32.totalorder %s97, %s99
      %p103 = scmp.eq.s32.totalorder %s16, 0
      %p104 = por %p102, %p103
      %p105 = scmp.ne.s32.totalorder %s97, %s99
      %p106 = scmp.eq.s32.totalorder %s21, 1
      %p107 = por %p105, %p106
      %p108 = scmp.ne.s32.totalorder %s99, %s100
      %p109 = scmp.eq.s32.totalorder %s21, 0
      %p110 = por %p108, %p109
      %p111 = scmp.ne.s32.totalorder %s99, %s100
      %p112 = scmp.eq.s32.totalorder %s22, 1
      %p113 = por %p111, %p112
      %p115 = scmp.ne.s32.totalorder %s100, %s114
      %p116 = scmp.eq.s32.totalorder %s22, 0
      %p117 = por %p115, %p116
      %s118 = ssub.s32 %s16, %s23
      %p119 = scmp.eq.s32.totalorder %s118, 0
      %s121 = sadd.s32 %s120, 1
      %s122 = scalar_select %p119, %s120, %s121
      %p125 = pneg %p119
      %p126 = scmp.eq.s32.totalorder %s16, 1
      %p127 = por %p125, %p126
      %p128 = scmp.ne.s32.totalorder %s120, %s123
      %p129 = scmp.eq.s32.totalorder %s16, 0
      %p130 = por %p128, %p129
      %p131 = scmp.ne.s32.totalorder %s120, %s123
      %p132 = scmp.eq.s32.totalorder %s21, 1
      %p133 = por %p131, %p132
      %p134 = scmp.ne.s32.totalorder %s123, %s124
      %p135 = scmp.eq.s32.totalorder %s21, 0
      %p136 = por %p134, %p135
      %p137 = scmp.ne.s32.totalorder %s123, %s124
      %p138 = scmp.eq.s32.totalorder %s22, 1
      %p139 = por %p137, %p138
      %p141 = scmp.ne.s32.totalorder %s124, %s140
      %p142 = scmp.eq.s32.totalorder %s22, 0
      %p143 = por %p141, %p142
      %p144 = scmp.le.s32.totalorder 1, %s16
      %p145 = scmp.lt.s32.totalorder %s16, 3
      %p146 = pnand %p144, %p145
      %p147 = pneg %p146
      // Predicated region
      $region9: #{tpu_custom_call.1} parent=5 // pred_check
        _
      $region10: #{tpu_custom_call.1} parent=5 // pred_check_branch
        %149 = sbr.rel (%p146) target = $region12
      $region11: #{tpu_custom_call.1} parent=5 // pred_region
        %s150 = ssub.s32 %s16, 1
        // Predicated region
        $region13: #{tpu_custom_call.1} parent=11 // pred_check
          %p151 = pneg %p89
        $region14: #{tpu_custom_call.1} parent=11 // pred_check_branch
          %153 = sbr.rel (%p151) target = $region16
        $region15: #{tpu_custom_call.1} parent=11 // pred_region
          _
        $region16: #{tpu_custom_call.1} parent=11 // pred_fallthru
          _
        // Predicated region
        $region17: #{tpu_custom_call.1} parent=11 // pred_check
          %p154 = pneg %p110
        $region18: #{tpu_custom_call.1} parent=11 // pred_check_branch
          %156 = sbr.rel (%p154) target = $region20
        $region19: #{tpu_custom_call.1} parent=11 // pred_region
          _
        $region20: #{tpu_custom_call.1} parent=11 // pred_fallthru
          _
      $region12: #{tpu_custom_call.1} parent=5 // pred_fallthru
        _
      %p157 = scmp.lt.s32.totalorder %s16, 2
      // Predicated region
      $region21: #{tpu_custom_call.1} parent=5 // pred_check
        %p158 = pneg %p157
      $region22: #{tpu_custom_call.1} parent=5 // pred_check_branch
        %160 = sbr.rel (%p158) target = $region24
      $region23: #{tpu_custom_call.1} parent=5 // pred_region
        // Predicated region
        $region25: #{tpu_custom_call.1} parent=23 // pred_check
          %p161 = pneg %p36
        $region26: #{tpu_custom_call.1} parent=23 // pred_check_branch
          %163 = sbr.rel (%p161) target = $region28
        $region27: #{tpu_custom_call.1} parent=23 // pred_region
          %s164 = sand.u32 %s26, 1
          %s165 = scalar_lea.sflag [#allocation3], %s164
          %s166 = sand.u32 %s26, 1
          %s167 = smul.addr %s166, 64
          %s168 = scalar_lea.vmem [#allocation2], %s167
          %s170 = ssub.s32 1024, 1024
          %171 = vsyncadd %s165, %s170
          %s172 = smul.addr %s16, 8
          %s173 = smul.addr %s172, 128
          %s174 = scalar_lea.hbm %s0, %s173
          %s175 = sshll.u32 %s168, 4
          %s176 = int_to_ptr.vmem [resolvable:$true] %s175
          %181 = dma.hbm_to_vmem [thread:$0]  %s174, 1024, %s176, %s165, 256, 256, 16
        $region28: #{tpu_custom_call.1} parent=23 // pred_fallthru
          _
        // Predicated region
        $region29: #{tpu_custom_call.1} parent=23 // pred_check
          %p182 = pneg %p62
        $region30: #{tpu_custom_call.1} parent=23 // pred_check_branch
          %184 = sbr.rel (%p182) target = $region32
        $region31: #{tpu_custom_call.1} parent=23 // pred_region
          %p185 = scmp.lt.s32.totalorder %s16, 1
          %s186 = scalar_select %p185, %s16, 1
          %s187 = smul.addr %s186, 2
          %s188 = scalar_lea.vmem %s1, %s187
        $region32: #{tpu_custom_call.1} parent=23 // pred_fallthru
          _
      $region24: #{tpu_custom_call.1} parent=5 // pred_fallthru
        _
      %p189 = scmp.le.s32.totalorder 1, %s16
      %p190 = scmp.lt.s32.totalorder %s16, 3
      %p191 = pnand %p189, %p190
      %p192 = pneg %p191
      // Predicated region
      $region33: #{tpu_custom_call.1} parent=5 // pred_check
        _
      $region34: #{tpu_custom_call.1} parent=5 // pred_check_branch
        %194 = sbr.rel (%p191) target = $region36
      $region35: #{tpu_custom_call.1} parent=5 // pred_region
        %s195 = ssub.s32 %s16, 1
        %s196 = sand.u32 %s29, 1
        %s197 = scalar_lea.sflag [#allocation3], %s196
        %s198 = sand.u32 %s29, 1
        %s199 = smul.addr %s198, 64
        %s200 = scalar_lea.vmem [#allocation2], %s199
        // Predicated region
        $region37: #{tpu_custom_call.1} parent=35 // pred_check
          %p201 = pneg %p42
        $region38: #{tpu_custom_call.1} parent=35 // pred_check_branch
          %203 = sbr.rel (%p201) target = $region40
        $region39: #{tpu_custom_call.1} parent=35 // pred_region
          %204 = dma.done %s197, 1024
        $region40: #{tpu_custom_call.1} parent=35 // pred_fallthru
          _
        %s205 = sand.u32 %s29, 1
        %s206 = scalar_lea.sflag [#allocation3], %s205
        %s207 = sand.u32 %s29, 1
        %s208 = smul.addr %s207, 64
        %s209 = scalar_lea.vmem [#allocation2], %s208
        %p210 = pneg %p42
        %p211 = pneg %p39
        %p212 = scmp.lt.s32.totalorder %s21, 1
        %s213 = scalar_select %p212, %s21, 1
        %s214 = smul.addr %s213, 2
        %s215 = scalar_lea.vmem %s1, %s214
        %p216 = pneg %p68
        %p217 = pneg %p65
        %p218 = pneg %p89
        %p219 = pneg %p86
        %p220 = pneg %p110
        %p221 = pneg %p107
        %p222 = pneg %p136
        %p223 = pneg %p133
        %s224 = sand.u32 %s123, 1
        %s225 = scalar_lea.sflag [#allocation4], %s224
        %s226 = sand.u32 %s123, 1
        %s227 = smul.addr %s226, 64
        %s228 = scalar_lea.vmem [#allocation5], %s227
        %p229 = scmp.lt.s32.totalorder %s21, 1
        %s230 = scalar_select %p229, %s21, 1
        %s231 = smul.addr %s230, 2
        %s232 = scalar_lea.vmem %s1, %s231
        %v233 = vld [vmem:[%s200] sm:$0xff]
        %v234 = vld [vmem:[%s200 + $0x8] sm:$0xff]
        %v235 = vld [vmem:[%s200 + $0x10] sm:$0xff]
        %v236 = vld [vmem:[%s200 + $0x18] sm:$0xff]
        %v237 = vld [vmem:[%s200 + $0x20] sm:$0xff]
        %v238 = vld [vmem:[%s200 + $0x28] sm:$0xff]
        %v239 = vld [vmem:[%s200 + $0x30] sm:$0xff]
        %v240 = vld [vmem:[%s200 + $0x38] sm:$0xff]
        %v241 = vld [vmem:[%s232] sm:$0x3]
        %v243 = vlaneseq
        %v244 = vshrl.u32 %v243, 7
        %v245 = vsub.s32 0, %v244
        %v246 = vrot.slane %v241, %v245
        %v247 = vlaneseq
        %v248 = vshrl.u32 %v247, 7
        %v249 = vsub.s32 1, %v248
        %v250 = vrot.slane %v241, %v249
        %vm253 = vcmask 1040384
        %v254 = vsel %vm253, %v246, 0.0
        %v255 = vsel %vm253, %v250, 0.0
        %v256 = vadd.f32 %v254, %v255
        %257 = vadd.xlane.f32.xlu0 %v256
        %v258 = vpop.xlane.xlu0 %257
        %vm259 = vcmp.eq.f32.partialorder %v258, 0.0
        %v260 = vsel %vm259, 1.0, %v258
        %v261 = vmul.f32 %v233, %v246
        %v262 = vmul.f32 %v234, %v250
        %v263 = vmul.f32 %v235, %v246
        %v264 = vmul.f32 %v236, %v250
        %v265 = vmul.f32 %v237, %v246
        %v266 = vmul.f32 %v238, %v250
        %v267 = vmul.f32 %v239, %v246
        %v268 = vmul.f32 %v240, %v250
        %v269 = vadd.f32 %v261, %v262
        %270 = vadd.xlane.f32.xlu0 %v269
        %v271 = vpop.xlane.xlu0 %270
        %v272 = vadd.f32 %v263, %v264
        %273 = vadd.xlane.f32.xlu0 %v272
        %v274 = vpop.xlane.xlu0 %273
        %v275 = vadd.f32 %v265, %v266
        %276 = vadd.xlane.f32.xlu0 %v275
        %v277 = vpop.xlane.xlu0 %276
        %v278 = vadd.f32 %v267, %v268
        %279 = vadd.xlane.f32.xlu0 %v278
        %v280 = vpop.xlane.xlu0 %279
        %v281 = vlaneseq
        %v282 = vshrl.u32 %v281, 7
        %v283 = vsub.s32 0, %v282
        %v284 = vrot.slane %v260, %v283
        %v285 = vrcp.pop %v284
        %v286 = vmul.f32 %v271, %v285
        %v287 = vmul.f32 %v274, %v285
        %v288 = vmul.f32 %v277, %v285
        %v289 = vmul.f32 %v280, %v285
        %v290 = vld [vmem:[%s2] sm:$0xff]
        %vm291 = vcmask 261120
        %v293 = vsel %vm291, %v290, 0
        %295 = vmatprep.subr.mxu0 0.0
        %296 = vmatpush1.msra.mxu0 %v286
        %297 = vmatprep.subr.mxu0 0.0
        %298 = vmatpush1.msra.mxu0 %v287
        %299 = vmatprep.subr.mxu0 0.0
        %300 = vmatpush1.msra.mxu0 %v288
        %301 = vmatprep.subr.mxu0 0.0
        %302 = vmatpush1.msra.mxu0 %v289
        %303 = vmatprep.subr.mxu0 0.0
        %304 = vmatpush1.msra.mxu0 0.0
        %305 = vmatprep.subr.mxu0 0.0
        %306 = vmatpush1.msra.mxu0 0.0
        %307 = vmatprep.subr.mxu0 0.0
        %308 = vmatpush1.msra.mxu0 0.0
        %309 = vmatprep.subr.mxu0 0.0
        %310 = vmatpush1.msra.mxu0 0.0
        %311 = vmatprep.subr.mxu0 0.0
        %312 = vmatpush1.msra.mxu0 0.0
        %313 = vmatprep.subr.mxu0 0.0
        %314 = vmatpush1.msra.mxu0 0.0
        %315 = vmatprep.subr.mxu0 0.0
        %316 = vmatpush1.msra.mxu0 0.0
        %317 = vmatprep.subr.mxu0 0.0
        %318 = vmatpush1.msra.mxu0 0.0
        %319 = vmatprep.subr.mxu0 0.0
        %320 = vmatpush1.msra.mxu0 0.0
        %321 = vmatprep.subr.mxu0 0.0
        %322 = vmatpush1.msra.mxu0 0.0
        %323 = vmatprep.subr.mxu0 0.0
        %324 = vmatpush1.msra.mxu0 0.0
        %325 = vmatprep.subr.mxu0 0.0
        %326 = vmatpush1.msra.mxu0 0.0
        %327 = vmatprep.subr.mxu0 0.0
        %328 = vmatpush1.msra.mxu0 0.0
        %329 = vmatprep.subr.mxu0 0.0
        %330 = vmatpush1.msra.mxu0 0.0
        %331 = vmatprep.subr.mxu0 0.0
        %332 = vmatpush1.msra.mxu0 0.0
        %333 = vmatprep.subr.mxu0 0.0
        %334 = vmatpush1.msra.mxu0 0.0
        %335 = vmatprep.subr.mxu0 0.0
        %336 = vmatpush1.msra.mxu0 0.0
        %337 = vmatprep.subr.mxu0 0.0
        %338 = vmatpush1.msra.mxu0 0.0
        %339 = vmatprep.subr.mxu0 0.0
        %340 = vmatpush1.msra.mxu0 0.0
        %341 = vmatprep.subr.mxu0 0.0
        %342 = vmatpush1.msra.mxu0 0.0
        %343 = vmatprep.subr.mxu0 0.0
        %344 = vmatpush1.msra.mxu0 0.0
        %345 = vmatprep.subr.mxu0 0.0
        %346 = vmatpush1.msra.mxu0 0.0
        %347 = vmatprep.subr.mxu0 0.0
        %348 = vmatpush1.msra.mxu0 0.0
        %349 = vmatprep.subr.mxu0 0.0
        %350 = vmatpush1.msra.mxu0 0.0
        %351 = vmatprep.subr.mxu0 0.0
        %352 = vmatpush1.msra.mxu0 0.0
        %353 = vmatprep.subr.mxu0 0.0
        %354 = vmatpush1.msra.mxu0 0.0
        %355 = vmatprep.subr.mxu0 0.0
        %356 = vmatpush1.msra.mxu0 0.0
        %357 = vmatprep.subr.mxu0 0.0
        %358 = vmatpush1.msra.mxu0 0.0
        %359 = vmatprep.mubr.f32.mxu0 0.0
        %360 = vmatmul.mubr.f32.gmra.mrb[0].mxu0 %v293
        %v361 = vpop.f32.mrb[0].mxu0
        %v362 = vadd.f32 0.0, %v361
        %v363 = vpop.f32.mrb[0].mxu0
        %364 = vdwg.mxu0
        %v365 = vmax.f32 %v362, 0.0
        %v366 = vld [vmem:[%s3] sm:$0xff]
        %v367 = vld [vmem:[%s3 + $0x8] sm:$0xff]
        %v368 = vld [vmem:[%s3 + $0x10] sm:$0xff]
        %v369 = vld [vmem:[%s3 + $0x18] sm:$0xff]
        %vm370 = vcmask 64512
        %v372 = vsel %vm370, %v366, 0
        %v375 = vsel %vm370, %v367, 0
        %v378 = vsel %vm370, %v368, 0
        %v381 = vsel %vm370, %v369, 0
        %383 = vmatprep.subr.mxu0 0.0
        %384 = vmatpush1.msra.mxu0 %v365
        %385 = vmatprep.subr.mxu0 0.0
        %386 = vmatpush1.msra.mxu0 0.0
        %387 = vmatprep.subr.mxu0 0.0
        %388 = vmatpush1.msra.mxu0 0.0
        %389 = vmatprep.subr.mxu0 0.0
        %390 = vmatpush1.msra.mxu0 0.0
        %391 = vmatprep.subr.mxu0 0.0
        %392 = vmatpush1.msra.mxu0 0.0
        %393 = vmatprep.subr.mxu0 0.0
        %394 = vmatpush1.msra.mxu0 0.0
        %395 = vmatprep.subr.mxu0 0.0
        %396 = vmatpush1.msra.mxu0 0.0
        %397 = vmatprep.subr.mxu0 0.0
        %398 = vmatpush1.msra.mxu0 0.0
        %399 = vmatprep.subr.mxu0 0.0
        %400 = vmatpush1.msra.mxu0 0.0
        %401 = vmatprep.subr.mxu0 0.0
        %402 = vmatpush1.msra.mxu0 0.0
        %403 = vmatprep.subr.mxu0 0.0
        %404 = vmatpush1.msra.mxu0 0.0
        %405 = vmatprep.subr.mxu0 0.0
        %406 = vmatpush1.msra.mxu0 0.0
        %407 = vmatprep.subr.mxu0 0.0
        %408 = vmatpush1.msra.mxu0 0.0
        %409 = vmatprep.subr.mxu0 0.0
        %410 = vmatpush1.msra.mxu0 0.0
        %411 = vmatprep.subr.mxu0 0.0
        %412 = vmatpush1.msra.mxu0 0.0
        %413 = vmatprep.subr.mxu0 0.0
        %414 = vmatpush1.msra.mxu0 0.0
        %415 = vmatprep.subr.mxu0 0.0
        %416 = vmatpush1.msra.mxu0 0.0
        %417 = vmatprep.subr.mxu0 0.0
        %418 = vmatpush1.msra.mxu0 0.0
        %419 = vmatprep.subr.mxu0 0.0
        %420 = vmatpush1.msra.mxu0 0.0
        %421 = vmatprep.subr.mxu0 0.0
        %422 = vmatpush1.msra.mxu0 0.0
        %423 = vmatprep.subr.mxu0 0.0
        %424 = vmatpush1.msra.mxu0 0.0
        %425 = vmatprep.subr.mxu0 0.0
        %426 = vmatpush1.msra.mxu0 0.0
        %427 = vmatprep.subr.mxu0 0.0
        %428 = vmatpush1.msra.mxu0 0.0
        %429 = vmatprep.subr.mxu0 0.0
        %430 = vmatpush1.msra.mxu0 0.0
        %431 = vmatprep.subr.mxu0 0.0
        %432 = vmatpush1.msra.mxu0 0.0
        %433 = vmatprep.subr.mxu0 0.0
        %434 = vmatpush1.msra.mxu0 0.0
        %435 = vmatprep.subr.mxu0 0.0
        %436 = vmatpush1.msra.mxu0 0.0
        %437 = vmatprep.subr.mxu0 0.0
        %438 = vmatpush1.msra.mxu0 0.0
        %439 = vmatprep.subr.mxu0 0.0
        %440 = vmatpush1.msra.mxu0 0.0
        %441 = vmatprep.subr.mxu0 0.0
        %442 = vmatpush1.msra.mxu0 0.0
        %443 = vmatprep.subr.mxu0 0.0
        %444 = vmatpush1.msra.mxu0 0.0
        %445 = vmatprep.subr.mxu0 0.0
        %446 = vmatpush1.msra.mxu0 0.0
        %447 = vmatprep.mubr.f32.mxu0 0.0
        %448 = vmatmul.mubr.f32.gmra.mrb[0].mxu0 %v372
        %v449 = vpop.f32.mrb[0].mxu0
        %v450 = vadd.f32 0.0, %v449
        %v451 = vpop.f32.mrb[0].mxu0
        %452 = vmatprep.mubr.f32.mxu0 0.0
        %453 = vmatmul.mubr.f32.gmra.mrb[0].mxu0 %v375
        %v454 = vpop.f32.mrb[0].mxu0
        %v455 = vadd.f32 0.0, %v454
        %v456 = vpop.f32.mrb[0].mxu0
        %457 = vmatprep.mubr.f32.mxu0 0.0
        %458 = vmatmul.mubr.f32.gmra.mrb[0].mxu0 %v378
        %v459 = vpop.f32.mrb[0].mxu0
        %v460 = vadd.f32 0.0, %v459
        %v461 = vpop.f32.mrb[0].mxu0
        %462 = vmatprep.mubr.f32.mxu0 0.0
        %463 = vmatmul.mubr.f32.gmra.mrb[0].mxu0 %v381
        %v464 = vpop.f32.mrb[0].mxu0
        %v465 = vadd.f32 0.0, %v464
        %v466 = vpop.f32.mrb[0].mxu0
        %467 = vdwg.mxu0
        %v468 = vsub.f32 0.0, %v450
        %v469 = vsub.f32 0.0, %v455
        %v470 = vsub.f32 0.0, %v460
        %v471 = vsub.f32 0.0, %v465
        %v472 = vmul.f32 %v468, 1.442695
        %v473 = vpow.pop %v472
        %v474 = vmul.f32 %v469, 1.442695
        %v475 = vpow.pop %v474
        %v476 = vmul.f32 %v470, 1.442695
        %v477 = vpow.pop %v476
        %v478 = vmul.f32 %v471, 1.442695
        %v479 = vpow.pop %v478
        %v480 = vadd.f32 %v473, 1.0
        %v481 = vadd.f32 %v475, 1.0
        %v482 = vadd.f32 %v477, 1.0
        %v483 = vadd.f32 %v479, 1.0
        %v484 = vrcp.pop %v480
        %v485 = vmul.f32 1.0, %v484
        %v486 = vrcp.pop %v481
        %v487 = vmul.f32 1.0, %v486
        %v488 = vrcp.pop %v482
        %v489 = vmul.f32 1.0, %v488
        %v490 = vrcp.pop %v483
        %v491 = vmul.f32 1.0, %v490
        %493 = vset.pattern.permute.xlu0 0
        %494 = vperm.xlu0 %493, %v485
        %v495 = vpop.permute.xlu0 %494
        %498 = vset.pattern.permute.xlu0 0
        %499 = vperm.xlu0 %498, %v487
        %v500 = vpop.permute.xlu0 %499
        %503 = vset.pattern.permute.xlu0 0
        %504 = vperm.xlu0 %503, %v489
        %v505 = vpop.permute.xlu0 %504
        %508 = vset.pattern.permute.xlu0 0
        %509 = vperm.xlu0 %508, %v491
        %v510 = vpop.permute.xlu0 %509
        %v512 = vmul.f32 %v233, %v495
        %v513 = vmul.f32 %v234, %v495
        %v514 = vmul.f32 %v235, %v500
        %v515 = vmul.f32 %v236, %v500
        %v516 = vmul.f32 %v237, %v505
        %v517 = vmul.f32 %v238, %v505
        %v518 = vmul.f32 %v239, %v510
        %v519 = vmul.f32 %v240, %v510
        %520 = vst [vmem:[%s228] sm:$0xff] %v512
        %521 = vst [vmem:[%s228 + $0x8] sm:$0xff] %v513
        %522 = vst [vmem:[%s228 + $0x10] sm:$0xff] %v514
        %523 = vst [vmem:[%s228 + $0x18] sm:$0xff] %v515
        %524 = vst [vmem:[%s228 + $0x20] sm:$0xff] %v516
        %525 = vst [vmem:[%s228 + $0x28] sm:$0xff] %v517
        %526 = vst [vmem:[%s228 + $0x30] sm:$0xff] %v518
        %527 = vst [vmem:[%s228 + $0x38] sm:$0xff] %v519
        %s528 = sand.u32 %s123, 1
        %s529 = scalar_lea.sflag [#allocation4], %s528
        %s530 = sand.u32 %s123, 1
        %s531 = smul.addr %s530, 64
        %s532 = scalar_lea.vmem [#allocation5], %s531
        // Predicated region
        $region41: #{tpu_custom_call.1} parent=35 // pred_check
          %p533 = pneg %p133
        $region42: #{tpu_custom_call.1} parent=35 // pred_check_branch
          %535 = sbr.rel (%p533) target = $region44
        $region43: #{tpu_custom_call.1} parent=35 // pred_region
          %s537 = ssub.s32 1024, 1024
          %538 = vsyncadd %s529, %s537
          %s539 = smul.addr %s21, 8
          %s540 = smul.addr %s539, 128
          %s541 = scalar_lea.hbm %s4, %s540
          %s542 = sshll.u32 %s532, 4
          %s543 = int_to_ptr.vmem [resolvable:$true] %s542
          %548 = dma.vmem_to_hbm [thread:$0]  %s543, 1024, %s541, %s529, 256, 256, 16
        $region44: #{tpu_custom_call.1} parent=35 // pred_fallthru
          _
      $region36: #{tpu_custom_call.1} parent=5 // pred_fallthru
        _
      %p549 = scmp.le.s32.totalorder 2, %s16
      // Predicated region
      $region45: #{tpu_custom_call.1} parent=5 // pred_check
        %p550 = pneg %p549
      $region46: #{tpu_custom_call.1} parent=5 // pred_check_branch
        %552 = sbr.rel (%p550) target = $region48
      $region47: #{tpu_custom_call.1} parent=5 // pred_region
        %s553 = ssub.s32 %s16, 2
        // Predicated region
        $region49: #{tpu_custom_call.1} parent=47 // pred_check
          %p554 = pneg %p139
        $region50: #{tpu_custom_call.1} parent=47 // pred_check_branch
          %556 = sbr.rel (%p554) target = $region52
        $region51: #{tpu_custom_call.1} parent=47 // pred_region
          %s557 = sand.u32 %s124, 1
          %s558 = scalar_lea.sflag [#allocation4], %s557
          %s559 = sand.u32 %s124, 1
          %s560 = smul.addr %s559, 64
          %s561 = scalar_lea.vmem [#allocation5], %s560
          %562 = dma.done %s558, 1024
        $region52: #{tpu_custom_call.1} parent=47 // pred_fallthru
          _
      $region48: #{tpu_custom_call.1} parent=5 // pred_fallthru
        _
    $region6: #{tpu_custom_call.1} parent=1 // loop_footer
      %s20 = sadd.s32 1, %s16
    $region7: #{tpu_custom_call.1} parent=1 // loop_footer_branch
      %15 = sbr.rel target = $region3
    $region8: #{tpu_custom_call.1} parent=1 // loop_exit
      _
    %563 = vsyncpa [#allocation3], 1
    %s564 = scalar_lea.sflag [#allocation3], 1
    %565 = vsyncpa %s564, 1
    %566 = vsyncpa [#allocation4], 1
    %s567 = scalar_lea.sflag [#allocation4], 1
    %568 = vsyncpa %s567, 1

</llo_original>
